<compile_context>
chip_gen: v7x
topology: tpu7x:2x2x1
jax: 0.10.0
libtpu: 0.0.40
codegen_flags: <defaults>
</compile_context>

<pallas_src>
import functools

import jax
import jax.numpy as jnp
from jax import lax
from jax.experimental import pallas as pl
from jax.experimental.pallas import tpu as pltpu

_VMEM_LIMIT = 32 * 1024 * 1024  # safe scoped-VMEM request on v5e/v6e/v7x


def _pick_tile(dim, candidates):
    """Largest candidate tile that evenly divides `dim`, else the full dim."""
    for t in candidates:
        if dim % t == 0:
            return t
    return dim


# ----------------------------- linear kernels ------------------------------ #

def _matmul_kernel(x_ref, w_ref, o_ref, acc_ref):
    # x: (tm, tk), w: (tk, tn) -> o: (tm, tn); K is the last ("arbitrary") grid axis.
    @pl.when(pl.program_id(2) == 0)
    def _():
        acc_ref[...] = jnp.zeros_like(acc_ref)

    acc_ref[...] += jnp.dot(x_ref[...], w_ref[...],
                            preferred_element_type=jnp.float32)

    @pl.when(pl.program_id(2) == pl.num_programs(2) - 1)
    def _():
        o_ref[...] = acc_ref[...].astype(o_ref.dtype)


def _matmul_bias_kernel(x_ref, w_ref, b_ref, o_ref, acc_ref):
    @pl.when(pl.program_id(2) == 0)
    def _():
        acc_ref[...] = jnp.zeros_like(acc_ref)

    acc_ref[...] += jnp.dot(x_ref[...], w_ref[...],
                            preferred_element_type=jnp.float32)

    @pl.when(pl.program_id(2) == pl.num_programs(2) - 1)
    def _():
        o_ref[...] = (acc_ref[...] + b_ref[...]).astype(o_ref.dtype)


def pallas_linear(x2d, w, b=None, *, out_dtype=None):
    """x2d: (M, K), w: (K, N), optional bias b: (N,) kept in f32."""
    M, K = x2d.shape
    K2, N = w.shape
    assert K == K2
    out_dtype = x2d.dtype if out_dtype is None else out_dtype

    # tm sits in a sublane (second-minor) position only -> any multiple of 8 is legal.
    tm = _pick_tile(M, (512, 256, 128, 64, 32, 16, 8))
    # tn / tk touch lane (minor) positions -> multiples of 128, else full dim.
    tn = _pick_tile(N, (512, 256, 128))
    tk = _pick_tile(K, (512, 256, 128))
    grid = (M // tm, N // tn, K // tk)

    x_spec = pl.BlockSpec((tm, tk), lambda i, j, k: (i, k))
    w_spec = pl.BlockSpec((tk, tn), lambda i, j, k: (k, j))
    o_spec = pl.BlockSpec((tm, tn), lambda i, j, k: (i, j))
    scratch = [pltpu.VMEM((tm, tn), jnp.float32)]
    cparams = pltpu.CompilerParams(
        dimension_semantics=("parallel", "parallel", "arbitrary"),
        vmem_limit_bytes=_VMEM_LIMIT)

    if b is None:
        return pl.pallas_call(
            _matmul_kernel,
            out_shape=jax.ShapeDtypeStruct((M, N), out_dtype),
            grid=grid,
            in_specs=[x_spec, w_spec],
            out_specs=o_spec,
            scratch_shapes=scratch,
            compiler_params=cparams,
        )(x2d, w)

    b2 = b.reshape(1, N).astype(jnp.float32)
    b_spec = pl.BlockSpec((1, tn), lambda i, j, k: (0, j))
    return pl.pallas_call(
        _matmul_bias_kernel,
        out_shape=jax.ShapeDtypeStruct((M, N), out_dtype),
        grid=grid,
        in_specs=[x_spec, w_spec, b_spec],
        out_specs=o_spec,
        scratch_shapes=scratch,
        compiler_params=cparams,
    )(x2d, w, b2)


# ---------------------------- attention kernel ------------------------------ #

def _flash_attention_kernel(q_ref, k_ref, v_ref, o_ref, m_ref, l_ref, acc_ref,
                            *, scale):
    # Blocks: q (G, tq, Dh), k/v (G, tkv, Dh) -> o (G, tq, Dh).
    # Online softmax over the kv-tile grid axis (last, "arbitrary").
    kv_idx = pl.program_id(2)

    @pl.when(kv_idx == 0)
    def _():
        m_ref[...] = jnp.full_like(m_ref, -jnp.inf)
        l_ref[...] = jnp.zeros_like(l_ref)
        acc_ref[...] = jnp.zeros_like(acc_ref)

    q = q_ref[...] * scale            # fold softmax scale into q (Sq*Dh mults)
    k = k_ref[...]
    v = v_ref[...]

    # (G, tq, Dh) x (G, tkv, Dh) contracting Dh directly -> (G, tq, tkv); no k.T.
    s = lax.dot_general(q, k,
                        dimension_numbers=(((2,), (2,)), ((0,), (0,))),
                        preferred_element_type=jnp.float32)

    m_prev = m_ref[...]
    m_new = jnp.maximum(m_prev, jnp.max(s, axis=-1, keepdims=True))
    alpha = jnp.exp(m_prev - m_new)
    p = jnp.exp(s - m_new)
    l_ref[...] = alpha * l_ref[...] + jnp.sum(p, axis=-1, keepdims=True)

    pv = lax.dot_general(p.astype(v.dtype), v,
                         dimension_numbers=(((2,), (1,)), ((0,), (0,))),
                         preferred_element_type=jnp.float32)
    acc_ref[...] = alpha * acc_ref[...] + pv
    m_ref[...] = m_new

    @pl.when(kv_idx == pl.num_programs(2) - 1)
    def _():
        inv_l = pl.reciprocal(l_ref[...], approx=True)   # EUP slot (nearly free)
        o_ref[...] = (acc_ref[...] * inv_l).astype(o_ref.dtype)


def _attn_tiles(BH, Sq, Skv, Dh, itemsize, *, max_group=8):
    """Pick (G, tq, tkv): biggest config whose double-buffered blocks + f32
    scratch fit comfortably inside the scoped-VMEM budget (v7x has 64 MiB)."""
    budget = _VMEM_LIMIT // 2
    for G in (max_group, 4, 2, 1):
        if G > BH or BH % G:
            continue
        for tq in (512, 256, 128, Sq):
            if Sq % tq:
                continue
            for tkv in (512, 256, 128, Skv):
                if Skv % tkv:
                    continue
                # q, k, v, o blocks double-buffered by the pipeline.
                blocks = 2 * G * (2 * tq * Dh + 2 * tkv * Dh) * itemsize
                scratch = G * tq * (Dh + 2) * 4
                if blocks + scratch <= budget:
                    return G, tq, tkv
    # Conservative fallback.
    tq = 128 if Sq % 128 == 0 else Sq
    tkv = 128 if Skv % 128 == 0 else Skv
    return 1, tq, tkv


def pallas_attention(q, k, v, scale, *, max_group=8):
    """q: (BH, Sq, Dh), k/v: (BH, Skv, Dh) -> (BH, Sq, Dh)."""
    BH, Sq, Dh = q.shape
    _, Skv, _ = k.shape

    G, tq, tkv = _attn_tiles(BH, Sq, Skv, Dh, q.dtype.itemsize,
                             max_group=max_group)
    grid = (BH // G, Sq // tq, Skv // tkv)

    kernel = functools.partial(_flash_attention_kernel, scale=scale)
    return pl.pallas_call(
        kernel,
        out_shape=jax.ShapeDtypeStruct((BH, Sq, Dh), q.dtype),
        grid=grid,
        in_specs=[pl.BlockSpec((G, tq, Dh), lambda g, i, j: (g, i, 0)),
                  pl.BlockSpec((G, tkv, Dh), lambda g, i, j: (g, j, 0)),
                  pl.BlockSpec((G, tkv, Dh), lambda g, i, j: (g, j, 0))],
        out_specs=pl.BlockSpec((G, tq, Dh), lambda g, i, j: (g, i, 0)),
        scratch_shapes=[pltpu.VMEM((G, tq, 1), jnp.float32),   # running max
                        pltpu.VMEM((G, tq, 1), jnp.float32),   # running denom
                        pltpu.VMEM((G, tq, Dh), jnp.float32)], # running numer
        compiler_params=pltpu.CompilerParams(
            dimension_semantics=("parallel", "parallel", "arbitrary"),
            vmem_limit_bytes=_VMEM_LIMIT),
    )(q, k, v)


# ------------------------------- module API --------------------------------- #

def init_cross_attention_params(key, query_dim, context_dim, heads, dim_head):
    inner_dim = heads * dim_head
    k1, k2, k3, k4 = jax.random.split(key, 4)
    scale_q = 1.0 / (query_dim ** 0.5)
    scale_c = 1.0 / (context_dim ** 0.5)
    scale_i = 1.0 / (inner_dim ** 0.5)
    # Stored as (in_dim, out_dim); equivalent to PyTorch Linear weight (out, in).T
    return {
        "wq": jax.random.normal(k1, (query_dim, inner_dim), jnp.float32) * scale_q,
        "wk": jax.random.normal(k2, (context_dim, inner_dim), jnp.float32) * scale_c,
        "wv": jax.random.normal(k3, (context_dim, inner_dim), jnp.float32) * scale_c,
        "wo": jax.random.normal(k4, (inner_dim, query_dim), jnp.float32) * scale_i,
        "bo": jnp.zeros((query_dim,), jnp.float32),
    }


def cross_attention_forward(x, params, heads, dim_head, context=None,
                            compute_dtype=jnp.float32):
    """Pallas implementation of CrossAttention.forward (eval mode)."""
    # TODO(synk): optional boolean `mask` argument not implemented (forward default is None).
    B, Sq, Dq = x.shape
    self_attn = context is None
    ctx = x if self_attn else context
    _, Skv, Dc = ctx.shape
    inner = heads * dim_head
    scale = dim_head ** (-0.5)

    xc = x.astype(compute_dtype)
    wq = params["wq"].astype(compute_dtype)
    wk = params["wk"].astype(compute_dtype)
    wv = params["wv"].astype(compute_dtype)

    if self_attn:
        # Fused QKV projection: x is read from HBM once.
        wqkv = jnp.concatenate([wq, wk, wv], axis=1)            # (Dq, 3*inner)
        qkv = pallas_linear(xc.reshape(B * Sq, Dq), wqkv)       # (B*Sq, 3*inner)
        q2d = qkv[:, :inner]
        k2d = qkv[:, inner:2 * inner]
        v2d = qkv[:, 2 * inner:]
    else:
        cc = ctx.astype(compute_dtype)
        q2d = pallas_linear(xc.reshape(B * Sq, Dq), wq)         # (B*Sq, inner)
        wkv = jnp.concatenate([wk, wv], axis=1)                 # (Dc, 2*inner)
        kv = pallas_linear(cc.reshape(B * Skv, Dc), wkv)        # (B*Skv, 2*inner)
        k2d = kv[:, :inner]
        v2d = kv[:, inner:]

    # reshape_heads_to_batch_dim.  Kept in XLA: dim_head is not a multiple of 128
    # lanes, so slicing heads out of the feature dim via a BlockSpec index_map
    # would require an unaligned lane-dim block.
    def to_bh(t2d, S):
        return (t2d.reshape(B, S, heads, dim_head)
                    .transpose(0, 2, 1, 3)
                    .reshape(B * heads, S, dim_head))

    q = to_bh(q2d, Sq)
    k = to_bh(k2d, Skv)
    v = to_bh(v2d, Skv)

    # Fused scaled-dot-product attention (flash-style online softmax).
    out = pallas_attention(q, k, v, scale)                      # (B*h, Sq, Dh)

    # reshape_batch_dim_to_heads
    out = (out.reshape(B, heads, Sq, dim_head)
               .transpose(0, 2, 1, 3)
               .reshape(B * Sq, inner))

    # to_out: Linear(inner_dim, query_dim) + Dropout (identity in eval mode).
    y = pallas_linear(out, params["wo"].astype(compute_dtype), params["bo"],
                      out_dtype=jnp.float32)
    return y.reshape(B, Sq, Dq)


# --------------------------- reference (plain JAX) -------------------------- #

def cross_attention_reference(x, params, heads, dim_head, context=None):
    B, Sq, Dq = x.shape
    ctx = x if context is None else context
    _, Skv, Dc = ctx.shape
    scale = dim_head ** (-0.5)
    q = x @ params["wq"]
    k = ctx @ params["wk"]
    v = ctx @ params["wv"]

    def to_bh(t, S):
        return t.reshape(B, S, heads, dim_head).transpose(0, 2, 1, 3).reshape(
            B * heads, S, dim_head)

    q, k, v = to_bh(q, Sq), to_bh(k, Skv), to_bh(v, Skv)
    sim = jnp.einsum("bid,bjd->bij", q, k) * scale
    attn = jax.nn.softmax(sim, axis=-1)
    out = jnp.einsum("bij,bjd->bid", attn, v)
    out = out.reshape(B, heads, Sq, dim_head).transpose(0, 2, 1, 3).reshape(
        B, Sq, heads * dim_head)
    return out @ params["wo"] + params["bo"]


# ---------------------------------- main ------------------------------------ #

if __name__ == "__main__":
    key = jax.random.PRNGKey(0)
    kx, kc, kp = jax.random.split(key, 3)

    # Small shapes consistent with the module.
    B, Sq, query_dim = 2, 8, 32
    Skv, context_dim = 8, 16
    heads, dim_head = 4, 8

    x = jax.random.normal(kx, (B, Sq, query_dim), jnp.float32)
    context = jax.random.normal(kc, (B, Skv, context_dim), jnp.float32)
    params = init_cross_attention_params(kp, query_dim, context_dim, heads, dim_head)
    params_self = init_cross_attention_params(kp, query_dim, query_dim, heads, dim_head)

    # f32 compute path: cross-attention (with context) and self-attention.
    y_cross = jax.block_until_ready(
        cross_attention_forward(x, params, heads, dim_head, context=context))
    y_self = jax.block_until_ready(
        cross_attention_forward(x, params_self, heads, dim_head, context=None))

    ref_cross = cross_attention_reference(x, params, heads, dim_head, context=context)
    ref_self = cross_attention_reference(x, params_self, heads, dim_head, context=None)

    # Only sources of deviation from the exact reference are the EUP approximate
    # reciprocal in the softmax and the online-softmax accumulation order; real
    # semantic bugs would produce O(1) errors on these O(1) outputs.
    assert y_cross.shape == (B, Sq, query_dim)
    assert y_self.shape == (B, Sq, query_dim)
    assert jnp.allclose(y_cross, ref_cross, atol=2e-2, rtol=2e-2)
    assert jnp.allclose(y_self, ref_self, atol=2e-2, rtol=2e-2)

    # bf16 compute path (v6e/v7x MXU-friendly): sanity-check shape / finiteness.
    y_bf16 = jax.block_until_ready(
        cross_attention_forward(x, params, heads, dim_head, context=context,
                                compute_dtype=jnp.bfloat16))
    assert y_bf16.shape == (B, Sq, query_dim)
    assert bool(jnp.all(jnp.isfinite(y_bf16)))

    print("KERNEL_OK")
</pallas_src>

<mosaic_0001>
module attributes {stable_mosaic.version = 11 : i64} {
  func.func @_matmul_kernel(%arg0: i32, %arg1: i32, %arg2: i32, %arg3: memref<16x32xf32, #tpu.memory_space<vmem>>, %arg4: memref<32x32xf32, #tpu.memory_space<vmem>>, %arg5: memref<16x32xf32, #tpu.memory_space<vmem>>, %arg6: memref<16x32xf32, #tpu.memory_space<vmem>>) attributes {dimension_semantics = [#tpu.dimension_semantics<parallel>, #tpu.dimension_semantics<parallel>, #tpu.dimension_semantics<arbitrary>], iteration_bounds = array<i64: 1, 1, 1>, scalar_prefetch = 0 : i64, scratch_operands = 1 : i64, tpu.core_type = #tpu.core_type<tc>, window_params = [{transform_indices = @transform_0, window_bounds = array<i64: 16, 32>}, {transform_indices = @transform_1, window_bounds = array<i64: 32, 32>}, {transform_indices = @transform_2, window_bounds = array<i64: 16, 32>}]} {
    %c0_i32 = arith.constant 0 : i32
    %0 = arith.cmpi eq, %arg2, %c0_i32 : i32
    %1 = arith.extui %0 : i1 to i32
    %c0_i32_0 = arith.constant 0 : i32
    %2 = arith.cmpi ne, %1, %c0_i32_0 : i32
    scf.if %2 {
      %cst_10 = arith.constant 0.000000e+00 : f32
      %12 = vector.broadcast %cst_10 : f32 to vector<16x32xf32>
      %c0_11 = arith.constant 0 : index
      %c0_12 = arith.constant 0 : index
      %13 = vector.load %arg6[%c0_11, %c0_12] : memref<16x32xf32, #tpu.memory_space<vmem>>, vector<16x32xf32>
      tpu.vector_store %arg6[%c0_11, %c0_12], %12 {strides = array<i32>} : memref<16x32xf32, #tpu.memory_space<vmem>>, vector<16x32xf32>,
    } else {
    }
    %c0 = arith.constant 0 : index
    %c0_1 = arith.constant 0 : index
    %3 = vector.load %arg6[%c0, %c0_1] : memref<16x32xf32, #tpu.memory_space<vmem>>, vector<16x32xf32>
    %c0_2 = arith.constant 0 : index
    %c0_3 = arith.constant 0 : index
    %4 = vector.load %arg3[%c0_2, %c0_3] : memref<16x32xf32, #tpu.memory_space<vmem>>, vector<16x32xf32>
    %c0_4 = arith.constant 0 : index
    %c0_5 = arith.constant 0 : index
    %5 = vector.load %arg4[%c0_4, %c0_5] : memref<32x32xf32, #tpu.memory_space<vmem>>, vector<32x32xf32>
    %cst = arith.constant dense<0.000000e+00> : vector<16x32xf32>
    %6 = tpu.matmul %4, %5, %cst {dimension_numbers = #tpu.dot_dimension_numbers<[1], [0], [0], [1], [0, 0, 1, 1], [], []>} : vector<16x32xf32>, vector<32x32xf32>, vector<16x32xf32> -> vector<16x32xf32>
    %7 = arith.addf %3, %6 : vector<16x32xf32>
    %c0_6 = arith.constant 0 : index
    %c0_7 = arith.constant 0 : index
    %8 = vector.load %arg6[%c0_6, %c0_7] : memref<16x32xf32, #tpu.memory_space<vmem>>, vector<16x32xf32>
    tpu.vector_store %arg6[%c0_6, %c0_7], %7 {strides = array<i32>} : memref<16x32xf32, #tpu.memory_space<vmem>>, vector<16x32xf32>,
    %c0_i32_8 = arith.constant 0 : i32
    %9 = arith.cmpi eq, %arg2, %c0_i32_8 : i32
    %10 = arith.extui %9 : i1 to i32
    %c0_i32_9 = arith.constant 0 : i32
    %11 = arith.cmpi ne, %10, %c0_i32_9 : i32
    scf.if %11 {
      %c0_10 = arith.constant 0 : index
      %c0_11 = arith.constant 0 : index
      %12 = vector.load %arg6[%c0_10, %c0_11] : memref<16x32xf32, #tpu.memory_space<vmem>>, vector<16x32xf32>
      %c0_12 = arith.constant 0 : index
      %c0_13 = arith.constant 0 : index
      %13 = vector.load %arg5[%c0_12, %c0_13] : memref<16x32xf32, #tpu.memory_space<vmem>>, vector<16x32xf32>
      tpu.vector_store %arg5[%c0_12, %c0_13], %12 {strides = array<i32>} : memref<16x32xf32, #tpu.memory_space<vmem>>, vector<16x32xf32>,
    } else {
    }
    return
  }
  func.func @transform_0(%arg0: i32, %arg1: i32, %arg2: i32) -> (i32, i32) {
    %c0_i32 = arith.constant 0 : i32
    return %arg0, %arg2 : i32, i32
  }
  func.func @transform_1(%arg0: i32, %arg1: i32, %arg2: i32) -> (i32, i32) {
    %c0_i32 = arith.constant 0 : i32
    return %arg2, %arg1 : i32, i32
  }
  func.func @transform_2(%arg0: i32, %arg1: i32, %arg2: i32) -> (i32, i32) {
    %c0_i32 = arith.constant 0 : i32
    return %arg0, %arg1 : i32, i32
  }
}

</mosaic_0001>

<llo_original>
// kernel: tpu_custom_call.1
$region0: #{tpu_custom_call.1}
  #allocation0 [shape = 'u32[]', space=smem, size = 0x4, offset = 0x4, fixed_abs, tag = 'smem constant byte address 0x4 - core index']
  #allocation1 [shape = 'u32[144,128]{1,0:T(1,128)}', space=vmem, size = 0x12000, scoped, tag = 'internal scratch']
  #allocation2 [shape = 'f32[16,32]{1,0:T(8,128)}', space=vmem, size = 0x2000, scoped, tag = 'scratch operand']
  %s0 = inlined_call_operand.hbm [shape: f32[16,32], index: 0, kind: input, shape index: {}]
  %s1 = inlined_call_operand.hbm [shape: f32[32,32], index: 1, kind: input, shape index: {}]
  %s2 = inlined_call_operand.hbm [shape: f32[16,32], index: 2, kind: output, shape index: {}]
  %s3 = sld [smem:[#allocation0]]
  $region34: #{tpu_custom_call.1} parent=0
    _
  %s5 = ssub.s32 1, %s3
  %s6 = scalar_select 0, %s5, %s3
  $region1: #{tpu_custom_call.1} parent=0
    #allocation3 [shape = 'u8[8192]{0}', space=vmem, size = 0x2000, scoped, tag = 'input window, operand 0, single buffered']
    #allocation4 [shape = 's32[1]{0}', space=sflag, size = 0x4, scoped, tag = 'scoped memory for tpu_custom_call.1']
    #allocation5 [shape = 's32[1]{0}', space=sflag, size = 0x4, scoped, tag = 'scoped memory for tpu_custom_call.1']
    #allocation6 [shape = 'u8[16384]{0}', space=vmem, size = 0x4000, scoped, tag = 'input window, operand 1, single buffered']
    #allocation7 [shape = 's32[1]{0}', space=sflag, size = 0x4, scoped, tag = 'scoped memory for tpu_custom_call.1']
    #allocation8 [shape = 'u8[8192]{0}', space=vmem, size = 0x2000, scoped, tag = 'output window, operand 0, single buffered']
    %7 = vsyncpa [#allocation4], 0
    %8 = vsyncpa [#allocation7], 0
    %9 = vsyncpa [#allocation5], 0
    // Predicated region
    $region2: #{tpu_custom_call.1} parent=1 // pred_check
      _
    $region3: #{tpu_custom_call.1} parent=1 // pred_check_branch
      %11 = sbr.rel (0) target = $region5
    $region4: #{tpu_custom_call.1} parent=1 // pred_region
      %s13 = ssub.s32 256, 256
      %14 = vsyncadd [#allocation4], %s13
      %s15 = sshll.u32 [#allocation3], 4
      %s16 = int_to_ptr.vmem [resolvable:$true] %s15
      %21 = dma.hbm_to_vmem [thread:$0]  %s0, 256, %s16, [#allocation4], 128, 128, 8
    $region5: #{tpu_custom_call.1} parent=1 // pred_fallthru
      _
    // Predicated region
    $region6: #{tpu_custom_call.1} parent=1 // pred_check
      _
    $region7: #{tpu_custom_call.1} parent=1 // pred_check_branch
      %23 = sbr.rel (0) target = $region9
    $region8: #{tpu_custom_call.1} parent=1 // pred_region
      %s25 = ssub.s32 512, 512
      %26 = vsyncadd [#allocation7], %s25
      %s27 = sshll.u32 [#allocation6], 4
      %s28 = int_to_ptr.vmem [resolvable:$true] %s27
      %33 = dma.hbm_to_vmem [thread:$0]  %s1, 512, %s28, [#allocation7], 128, 128, 8
    $region9: #{tpu_custom_call.1} parent=1 // pred_fallthru
      _
    // Predicated region
    $region10: #{tpu_custom_call.1} parent=1 // pred_check
      _
    $region11: #{tpu_custom_call.1} parent=1 // pred_check_branch
      %35 = sbr.rel (0) target = $region13
    $region12: #{tpu_custom_call.1} parent=1 // pred_region
      %36 = dma.done [#allocation4], 256
    $region13: #{tpu_custom_call.1} parent=1 // pred_fallthru
      _
    // Predicated region
    $region14: #{tpu_custom_call.1} parent=1 // pred_check
      _
    $region15: #{tpu_custom_call.1} parent=1 // pred_check_branch
      %38 = sbr.rel (0) target = $region17
    $region16: #{tpu_custom_call.1} parent=1 // pred_region
      %39 = dma.done [#allocation7], 512
    $region17: #{tpu_custom_call.1} parent=1 // pred_fallthru
      _
    %p40 = scmp.eq.s32.totalorder 0, 0
    // Predicated region
    $region18: #{tpu_custom_call.1} parent=1 // pred_check
      %p41 = pneg %p40
    $region19: #{tpu_custom_call.1} parent=1 // pred_check_branch
      %43 = sbr.rel (%p41) target = $region21
    $region20: #{tpu_custom_call.1} parent=1 // pred_region
      %vm44 = vcmask 261120
      %45 = vst.msk [vmem:[#allocation2] sm:$0xff] %vm44, 0.0
      %46 = vst.msk [vmem:[#allocation2 + $0x8] sm:$0xff] %vm44, 0.0
    $region21: #{tpu_custom_call.1} parent=1 // pred_fallthru
      _
    %v47 = vld [vmem:[#allocation2] sm:$0xff]
    %v48 = vld [vmem:[#allocation2 + $0x8] sm:$0xff]
    %v49 = vld [vmem:[#allocation3] sm:$0xff]
    %v50 = vld [vmem:[#allocation3 + $0x8] sm:$0xff]
    %v51 = vld [vmem:[#allocation6] sm:$0xff]
    %v52 = vld [vmem:[#allocation6 + $0x8] sm:$0xff]
    %v53 = vld [vmem:[#allocation6 + $0x10] sm:$0xff]
    %v54 = vld [vmem:[#allocation6 + $0x18] sm:$0xff]
    %vm55 = vcmask 261120
    %v57 = vsel %vm55, %v49, 0
    %v60 = vsel %vm55, %v50, 0
    %62 = vmatprep.subr.mxu0 0.0
    %63 = vmatpush1.msra.mxu0 %v51
    %64 = vmatprep.subr.mxu0 0.0
    %65 = vmatpush1.msra.mxu0 %v52
    %66 = vmatprep.subr.mxu0 0.0
    %67 = vmatpush1.msra.mxu0 %v53
    %68 = vmatprep.subr.mxu0 0.0
    %69 = vmatpush1.msra.mxu0 %v54
    %70 = vmatprep.subr.mxu0 0.0
    %71 = vmatpush1.msra.mxu0 0.0
    %72 = vmatprep.subr.mxu0 0.0
    %73 = vmatpush1.msra.mxu0 0.0
    %74 = vmatprep.subr.mxu0 0.0
    %75 = vmatpush1.msra.mxu0 0.0
    %76 = vmatprep.subr.mxu0 0.0
    %77 = vmatpush1.msra.mxu0 0.0
    %78 = vmatprep.subr.mxu0 0.0
    %79 = vmatpush1.msra.mxu0 0.0
    %80 = vmatprep.subr.mxu0 0.0
    %81 = vmatpush1.msra.mxu0 0.0
    %82 = vmatprep.subr.mxu0 0.0
    %83 = vmatpush1.msra.mxu0 0.0
    %84 = vmatprep.subr.mxu0 0.0
    %85 = vmatpush1.msra.mxu0 0.0
    %86 = vmatprep.subr.mxu0 0.0
    %87 = vmatpush1.msra.mxu0 0.0
    %88 = vmatprep.subr.mxu0 0.0
    %89 = vmatpush1.msra.mxu0 0.0
    %90 = vmatprep.subr.mxu0 0.0
    %91 = vmatpush1.msra.mxu0 0.0
    %92 = vmatprep.subr.mxu0 0.0
    %93 = vmatpush1.msra.mxu0 0.0
    %94 = vmatprep.subr.mxu0 0.0
    %95 = vmatpush1.msra.mxu0 0.0
    %96 = vmatprep.subr.mxu0 0.0
    %97 = vmatpush1.msra.mxu0 0.0
    %98 = vmatprep.subr.mxu0 0.0
    %99 = vmatpush1.msra.mxu0 0.0
    %100 = vmatprep.subr.mxu0 0.0
    %101 = vmatpush1.msra.mxu0 0.0
    %102 = vmatprep.subr.mxu0 0.0
    %103 = vmatpush1.msra.mxu0 0.0
    %104 = vmatprep.subr.mxu0 0.0
    %105 = vmatpush1.msra.mxu0 0.0
    %106 = vmatprep.subr.mxu0 0.0
    %107 = vmatpush1.msra.mxu0 0.0
    %108 = vmatprep.subr.mxu0 0.0
    %109 = vmatpush1.msra.mxu0 0.0
    %110 = vmatprep.subr.mxu0 0.0
    %111 = vmatpush1.msra.mxu0 0.0
    %112 = vmatprep.subr.mxu0 0.0
    %113 = vmatpush1.msra.mxu0 0.0
    %114 = vmatprep.subr.mxu0 0.0
    %115 = vmatpush1.msra.mxu0 0.0
    %116 = vmatprep.subr.mxu0 0.0
    %117 = vmatpush1.msra.mxu0 0.0
    %118 = vmatprep.subr.mxu0 0.0
    %119 = vmatpush1.msra.mxu0 0.0
    %120 = vmatprep.subr.mxu0 0.0
    %121 = vmatpush1.msra.mxu0 0.0
    %122 = vmatprep.subr.mxu0 0.0
    %123 = vmatpush1.msra.mxu0 0.0
    %124 = vmatprep.subr.mxu0 0.0
    %125 = vmatpush1.msra.mxu0 0.0
    %126 = vmatprep.mubr.f32.mxu0 0.0
    %127 = vmatmul.mubr.f32.gmra.mrb[0].mxu0 %v57
    %v128 = vpop.f32.mrb[0].mxu0
    %v129 = vadd.f32 0.0, %v128
    %v130 = vpop.f32.mrb[0].mxu0
    %131 = vmatprep.mubr.f32.mxu0 0.0
    %132 = vmatmul.mubr.f32.gmra.mrb[0].mxu0 %v60
    %v133 = vpop.f32.mrb[0].mxu0
    %v134 = vadd.f32 0.0, %v133
    %v135 = vpop.f32.mrb[0].mxu0
    %136 = vdwg.mxu0
    %v137 = vadd.f32 %v47, %v129
    %v138 = vadd.f32 %v48, %v134
    %139 = vst.msk [vmem:[#allocation2] sm:$0xff] %vm55, %v137
    %140 = vst.msk [vmem:[#allocation2 + $0x8] sm:$0xff] %vm55, %v138
    // Predicated region
    $region22: #{tpu_custom_call.1} parent=1 // pred_check
      %p141 = pneg %p40
    $region23: #{tpu_custom_call.1} parent=1 // pred_check_branch
      %143 = sbr.rel (%p141) target = $region25
    $region24: #{tpu_custom_call.1} parent=1 // pred_region
      %v144 = vld [vmem:[#allocation2] sm:$0xff]
      %v145 = vld [vmem:[#allocation2 + $0x8] sm:$0xff]
      %146 = vst.msk [vmem:[#allocation8] sm:$0xff] %vm55, %v144
      %147 = vst.msk [vmem:[#allocation8 + $0x8] sm:$0xff] %vm55, %v145
    $region25: #{tpu_custom_call.1} parent=1 // pred_fallthru
      _
    // Predicated region
    $region26: #{tpu_custom_call.1} parent=1 // pred_check
      _
    $region27: #{tpu_custom_call.1} parent=1 // pred_check_branch
      %149 = sbr.rel (0) target = $region29
    $region28: #{tpu_custom_call.1} parent=1 // pred_region
      %s151 = ssub.s32 256, 256
      %152 = vsyncadd [#allocation5], %s151
      %s153 = sshll.u32 [#allocation8], 4
      %s154 = int_to_ptr.vmem [resolvable:$true] %s153
      %159 = dma.vmem_to_hbm [thread:$0]  %s154, 256, %s2, [#allocation5], 128, 128, 8
    $region29: #{tpu_custom_call.1} parent=1 // pred_fallthru
      _
    // Predicated region
    $region30: #{tpu_custom_call.1} parent=1 // pred_check
      _
    $region31: #{tpu_custom_call.1} parent=1 // pred_check_branch
      %161 = sbr.rel (0) target = $region33
    $region32: #{tpu_custom_call.1} parent=1 // pred_region
      %162 = dma.done [#allocation5], 256
    $region33: #{tpu_custom_call.1} parent=1 // pred_fallthru
      _
    %163 = vsyncpa [#allocation4], 1
    %164 = vsyncpa [#allocation7], 1
    %165 = vsyncpa [#allocation5], 1

</llo_original>
